<compile_context>
chip_gen: v6e
topology: v6e:2x2x1
jax: 0.10.0
libtpu: 0.0.40
codegen_flags: <defaults>
</compile_context>

<pallas_src>
import jax
import jax.numpy as jnp
from jax import lax
from jax.experimental import pallas as pl
from jax.experimental.pallas import tpu as pltpu


_ONEHOT_MAX_L = 512        # above this the O(L^2) one-hot matmul turns compute-bound
_MAX_GATHER_ROWS = 32      # permuted-row DMAs issued per grid step on the DMA path


def _vmem_limit_bytes():
    """Scoped-VMEM budget: 75% of physical VMEM, capped at 100 MiB (safe on v5e/v6e/v7x)."""
    try:
        cap = int(pltpu.get_tpu_info().vmem_capacity_bytes)
        return min(cap * 3 // 4, 100 * 1024 * 1024)
    except Exception:
        return 48 * 1024 * 1024


def _choose_tile(n, preferred, align):
    """Largest tile <= preferred that divides n and is a multiple of align; else full n."""
    if n <= preferred:
        return n
    t = (preferred // align) * align
    while t >= align:
        if n % t == 0:
            return t
        t -= align
    # TODO(synk): no aligned divisor -> full extent; pathological (e.g. huge prime) dims
    # can exceed the VMEM budget here.
    return n


def _choose_gather_rows(length, max_rows=_MAX_GATHER_ROWS):
    """Rows gathered per grid step on the DMA path (must divide L, sublane friendly)."""
    if length % 8 == 0:
        t = (min(length, max_rows) // 8) * 8
        while t >= 8:
            if length % t == 0:
                return t
            t -= 8
    if length <= max_rows:
        return length      # full-extent block: always layout-legal
    return None            # no clean tiling -> caller falls back to the one-hot path


# --------------------------------------------------------------------------- #
# Path 1 (small L, float dtypes): one-hot permutation matmul on the MXU.
# --------------------------------------------------------------------------- #
def _onehot_kernel(idx_ref, x_ref, o_ref):
    """idx_ref: VMEM (1, TL, 1) int32; x_ref: VMEM (1, L, TD); o_ref: VMEM (1, TL, TD)."""
    l_src = x_ref.shape[1]
    tl = o_ref.shape[1]

    idx = idx_ref[0]                                           # (TL, 1)
    col = lax.broadcasted_iota(jnp.int32, (tl, l_src), 1)      # source row ids
    cdt = x_ref.dtype if jnp.issubdtype(x_ref.dtype, jnp.floating) else jnp.float32
    onehot = (idx == col).astype(cdt)                          # (TL, L) via VPU compares
    gathered = jnp.dot(onehot, x_ref[0].astype(cdt),
                       preferred_element_type=jnp.float32)     # (TL, TD) on the MXU
    o_ref[0] = gathered.astype(o_ref.dtype)


def _shuffle_onehot(x, indices, vmem_limit):
    B, L, D = x.shape
    itemsize = jnp.dtype(x.dtype).itemsize
    budget = int(vmem_limit * 0.8)

    TL = _choose_tile(L, preferred=128, align=8)
    TD = D
    for pref in (512, 256, 128):
        cand = _choose_tile(D, preferred=pref, align=128)
        need = (2 * L * cand * itemsize        # double-buffered full-L x slab
                + 2 * TL * cand * itemsize     # double-buffered output tile
                + 2 * TL * 4                   # index tiles
                + 8 * TL * L)                  # iota + one-hot temporaries
        TD = cand
        if need <= budget or cand == D:
            break

    nD, nL = D // TD, L // TL
    idx3 = indices[:, :, None]                 # (B, L, 1): tiny VMEM vector input

    grid_spec = pltpu.PrefetchScalarGridSpec(
        num_scalar_prefetch=0,
        grid=(B, nD, nL),                      # L innermost: x slab held resident
        in_specs=[
            pl.BlockSpec((1, TL, 1), lambda b, d, l: (b, l, 0)),   # permutation indices
            pl.BlockSpec((1, L, TD), lambda b, d, l: (b, 0, d)),   # full-L source slab
        ],
        out_specs=pl.BlockSpec((1, TL, TD), lambda b, d, l: (b, l, d)),
    )
    cost = pl.CostEstimate(
        flops=2 * B * L * L * D,
        transcendentals=0,
        bytes_accessed=2 * B * L * D * itemsize + B * L * 4,
    )
    return pl.pallas_call(
        _onehot_kernel,
        out_shape=jax.ShapeDtypeStruct((B, L, D), x.dtype),
        grid_spec=grid_spec,
        compiler_params=pltpu.CompilerParams(
            dimension_semantics=("parallel", "parallel", "parallel"),
            vmem_limit_bytes=vmem_limit,
        ),
        cost_estimate=cost,
    )(idx3, x)


# --------------------------------------------------------------------------- #
# Path 2 (large L or integer dtypes): scalar-prefetch-driven DMA row gather.
# --------------------------------------------------------------------------- #
def _dma_gather_kernel(idx_ref, x_hbm, o_ref, sem):
    """idx_ref: SMEM (B*L,) int32; x_hbm: HBM (B, L, D); o_ref: VMEM (1, TLG, TD)."""
    b = pl.program_id(0)
    d = pl.program_id(1)
    tile = pl.program_id(2)
    tlg = o_ref.shape[1]
    td = o_ref.shape[2]
    seq = x_hbm.shape[1]
    base = b * seq + tile * tlg
    col0 = d * td

    # Issue one DMA per permuted source row straight into the output block, then drain.
    # All copies share one DMA semaphore; total waits == total signals, and all data is
    # in place once the last wait returns.
    for r in range(tlg):
        src = idx_ref[base + r]
        pltpu.make_async_copy(
            x_hbm.at[pl.ds(b, 1), pl.ds(src, 1), pl.ds(col0, td)],
            o_ref.at[pl.ds(0, 1), pl.ds(r, 1), :],
            sem.at[0],
        ).start()
    for r in range(tlg):
        pltpu.make_async_copy(
            x_hbm.at[pl.ds(b, 1), pl.ds(0, 1), pl.ds(0, td)],
            o_ref.at[pl.ds(0, 1), pl.ds(r, 1), :],
            sem.at[0],
        ).wait()


def _shuffle_dma(x, indices, tlg, vmem_limit):
    B, L, D = x.shape
    itemsize = jnp.dtype(x.dtype).itemsize

    # D tile: keep the double-buffered output block inside a fraction of the budget.
    TD = D
    out_budget = max(int(vmem_limit * 0.25), 128 * 128 * itemsize)
    if 2 * tlg * TD * itemsize > out_budget:
        TD = _choose_tile(D, preferred=max(128, out_budget // (2 * tlg * itemsize)),
                          align=128)
    nD, nL = D // TD, L // tlg

    idx_flat = indices.reshape(-1)            # 1-D SMEM scalar-prefetch table

    grid_spec = pltpu.PrefetchScalarGridSpec(
        num_scalar_prefetch=1,
        grid=(B, nD, nL),
        in_specs=[pl.BlockSpec(memory_space=pl.ANY)],   # x stays in HBM; manual DMA
        out_specs=pl.BlockSpec((1, tlg, TD), lambda b, d, l, idx: (b, l, d)),
        scratch_shapes=[pltpu.SemaphoreType.DMA((1,))],
    )
    cost = pl.CostEstimate(
        flops=0,
        transcendentals=0,
        bytes_accessed=2 * B * L * D * itemsize + B * L * 4,
    )
    return pl.pallas_call(
        _dma_gather_kernel,
        out_shape=jax.ShapeDtypeStruct((B, L, D), x.dtype),
        grid_spec=grid_spec,
        compiler_params=pltpu.CompilerParams(
            dimension_semantics=("parallel", "parallel", "parallel"),
            vmem_limit_bytes=vmem_limit,
        ),
        cost_estimate=cost,
    )(idx_flat, x)


# --------------------------------------------------------------------------- #
# Public wrapper (matches ShufflePatches.forward semantics).
# --------------------------------------------------------------------------- #
@jax.jit
def shuffle_patches(x, key):
    """Returns (shuffled_x, indices) with shapes (B, L, D), (B, L, D)."""
    B, L, D = x.shape

    # Random permutation per batch row (plain-JAX glue: rand + argsort along L).
    noise = jax.random.uniform(key, (B, L))
    indices = jnp.argsort(noise, axis=1).astype(jnp.int32)          # (B, L)

    vmem_limit = _vmem_limit_bytes()
    is_float = jnp.issubdtype(x.dtype, jnp.floating)
    tlg = _choose_gather_rows(L)

    # Large L (mem-bound regime) and integer dtypes (exact bits) take the DMA path;
    # small float L keeps the one-hot MXU fast path.
    use_dma = (L > _ONEHOT_MAX_L or not is_float) and tlg is not None
    if use_dma:
        shuffled = _shuffle_dma(x, indices, tlg, vmem_limit)
    else:
        # TODO(synk): integer inputs falling back here round-trip through f32 on the
        # MXU (exact only for |value| < 2**24); only happens for awkward L with no
        # sublane-friendly divisor.
        shuffled = _shuffle_onehot(x, indices, vmem_limit)

    # The index output is a pure broadcast of (B, L); build it outside the kernel so
    # the kernel's HBM write traffic stays at a single (B, L, D) tensor.
    idx_full = jnp.broadcast_to(indices[:, :, None], (B, L, D))
    return shuffled, idx_full


if __name__ == "__main__":
    key = jax.random.PRNGKey(0)
    k_x, k_s1, k_x2, k_s2 = jax.random.split(key, 4)

    # Case 1: float input -> one-hot MXU fast path (small L).
    B, L, D = 2, 8, 32
    x = jax.random.normal(k_x, (B, L, D), dtype=jnp.float32)
    shuffled, idx_full = shuffle_patches(x, k_s1)
    jax.block_until_ready((shuffled, idx_full))

    ref_idx = jnp.argsort(jax.random.uniform(k_s1, (B, L)), axis=1).astype(jnp.int32)
    ref_idx_full = jnp.broadcast_to(ref_idx[:, :, None], (B, L, D))
    ref_shuffled = jnp.take_along_axis(x, ref_idx_full, axis=1)
    assert shuffled.shape == (B, L, D) and shuffled.dtype == x.dtype
    assert jnp.array_equal(idx_full, ref_idx_full)
    assert jnp.allclose(shuffled, ref_shuffled)

    # Case 2: integer input -> DMA row-gather path (exact bits), still small shapes.
    B2, L2, D2 = 2, 16, 128
    x2 = jax.random.randint(k_x2, (B2, L2, D2), minval=-(2 ** 30), maxval=2 ** 30,
                            dtype=jnp.int32)
    shuffled2, idx_full2 = shuffle_patches(x2, k_s2)
    jax.block_until_ready((shuffled2, idx_full2))

    ref_idx2 = jnp.argsort(jax.random.uniform(k_s2, (B2, L2)), axis=1).astype(jnp.int32)
    ref_idx_full2 = jnp.broadcast_to(ref_idx2[:, :, None], (B2, L2, D2))
    ref_shuffled2 = jnp.take_along_axis(x2, ref_idx_full2, axis=1)
    assert shuffled2.dtype == x2.dtype
    assert jnp.array_equal(idx_full2, ref_idx_full2)
    assert jnp.array_equal(shuffled2, ref_shuffled2)

    print("KERNEL_OK")
</pallas_src>

<mosaic_0001>
module attributes {stable_mosaic.version = 11 : i64} {
  func.func @_onehot_kernel(%arg0: i32, %arg1: i32, %arg2: i32, %arg3: memref<1x8x1xi32, #tpu.memory_space<vmem>>, %arg4: memref<1x8x32xf32, #tpu.memory_space<vmem>>, %arg5: memref<1x8x32xf32, #tpu.memory_space<vmem>>) attributes {dimension_semantics = [#tpu.dimension_semantics<parallel>, #tpu.dimension_semantics<parallel>, #tpu.dimension_semantics<parallel>], iteration_bounds = array<i64: 2, 1, 1>, scalar_prefetch = 0 : i64, scratch_operands = 0 : i64, tpu.core_type = #tpu.core_type<tc>, window_params = [{transform_indices = @transform_0, window_bounds = array<i64: 1, 8, 1>}, {transform_indices = @transform_1, window_bounds = array<i64: 1, 8, 32>}, {transform_indices = @transform_2, window_bounds = array<i64: 1, 8, 32>}]} {
    %c0 = arith.constant 0 : index
    %c0_0 = arith.constant 0 : index
    %c0_1 = arith.constant 0 : index
    %0 = vector.load %arg3[%c0, %c0_0, %c0_1] : memref<1x8x1xi32, #tpu.memory_space<vmem>>, vector<1x8x1xi32>
    %1 = vector.shape_cast %0 : vector<1x8x1xi32> to vector<8x1xi32>
    %2 = tpu.iota {dimensions = array<i32: 1>} : vector<8x8xi32>
    %3 = vector.broadcast %1 : vector<8x1xi32> to vector<8x8xi32>
    %4 = arith.cmpi eq, %3, %2 : vector<8x8xi32>
    %5 = arith.extui %4 : vector<8x8xi1> to vector<8x8xi32>
    %6 = arith.sitofp %5 : vector<8x8xi32> to vector<8x8xf32>
    %c0_2 = arith.constant 0 : index
    %c0_3 = arith.constant 0 : index
    %c0_4 = arith.constant 0 : index
    %7 = vector.load %arg4[%c0_2, %c0_3, %c0_4] : memref<1x8x32xf32, #tpu.memory_space<vmem>>, vector<1x8x32xf32>
    %8 = vector.shape_cast %7 : vector<1x8x32xf32> to vector<8x32xf32>
    %cst = arith.constant dense<0.000000e+00> : vector<8x32xf32>
    %9 = tpu.matmul %6, %8, %cst {dimension_numbers = #tpu.dot_dimension_numbers<[1], [0], [0], [1], [0, 0, 1, 1], [], []>} : vector<8x8xf32>, vector<8x32xf32>, vector<8x32xf32> -> vector<8x32xf32>
    %c0_5 = arith.constant 0 : index
    %c0_6 = arith.constant 0 : index
    %c0_7 = arith.constant 0 : index
    %10 = vector.load %arg5[%c0_5, %c0_6, %c0_7] : memref<1x8x32xf32, #tpu.memory_space<vmem>>, vector<1x8x32xf32>
    %11 = vector.shape_cast %10 : vector<1x8x32xf32> to vector<8x32xf32>
    %12 = vector.shape_cast %9 : vector<8x32xf32> to vector<1x8x32xf32>
    tpu.vector_store %arg5[%c0_5, %c0_6, %c0_7], %12 {strides = array<i32>} : memref<1x8x32xf32, #tpu.memory_space<vmem>>, vector<1x8x32xf32>,
    return
  }
  func.func @transform_0(%arg0: i32, %arg1: i32, %arg2: i32) -> (i32, i32, i32) {
    %c0_i32 = arith.constant 0 : i32
    %c0_i32_0 = arith.constant 0 : i32
    return %arg0, %arg2, %c0_i32 : i32, i32, i32
  }
  func.func @transform_1(%arg0: i32, %arg1: i32, %arg2: i32) -> (i32, i32, i32) {
    %c0_i32 = arith.constant 0 : i32
    %c0_i32_0 = arith.constant 0 : i32
    return %arg0, %c0_i32, %arg1 : i32, i32, i32
  }
  func.func @transform_2(%arg0: i32, %arg1: i32, %arg2: i32) -> (i32, i32, i32) {
    %c0_i32 = arith.constant 0 : i32
    return %arg0, %arg2, %arg1 : i32, i32, i32
  }
}

</mosaic_0001>

<llo_original>
// kernel: shuffle_patches.1
$region0: #{shuffle_patches.1}
  #allocation0 [shape = 'u32[]', space=smem, size = 0x4, offset = 0x4, fixed_abs, tag = 'smem constant byte address 0x4 - core index']
  #allocation1 [shape = 'u32[144,128]{1,0:T(1,128)}', space=vmem, size = 0x12000, scoped, tag = 'internal scratch']
  %s0 = inlined_call_operand.vmem [shape: s32[2,8,1], index: 0, kind: input, shape index: {}]
  %s1 = inlined_call_operand.vmem [shape: f32[2,8,32], index: 1, kind: input, shape index: {}]
  %s2 = inlined_call_operand.hbm [shape: f32[2,8,32], index: 2, kind: output, shape index: {}]
  %s3 = sld [smem:[#allocation0]]
  $region41: #{shuffle_patches.1} parent=0
    _
  %s5 = ssub.s32 1, %s3
  %s6 = scalar_select 0, %s5, %s3
  $region1: #{shuffle_patches.1} parent=0
    #allocation2 [shape = 'u8[8192]{0}', space=vmem, size = 0x2000, scoped, tag = 'output window, operand 0']
    #allocation3 [shape = 's32[2]{0}', space=sflag, size = 0x8, scoped, tag = 'scoped memory for shuffle_patches.1']
    %7 = vsyncpa [#allocation3], 0
    %s8 = scalar_lea.sflag [#allocation3], 1
    %9 = vsyncpa %s8, 0
    loop: start=0, step=1, limit=4
    $region2: #{shuffle_patches.1} parent=1 // loop_pre_header
      _
    $region3: #{shuffle_patches.1} parent=1 // loop_header
      %s11 = sphi 0, %s15
      %p12 = scmp.ge.s32.totalorder %s11, 4
      %s18 = sphi 0, %s37
      %s19 = sphi 0, %s33
      %s20 = sphi 0, %s29
      %s21 = sphi 0, %s18
      %s22 = sphi 0, %s19
      %s23 = sphi 0, %s20
      %s24 = sphi 0, %s21
      %s25 = sphi 0, %s22
      %s26 = sphi 0, %s23
      %s42 = sphi 0, %s44
      %s45 = sphi 0, %s42
      %s46 = sphi 0, %s45
      %s62 = sphi 0, %s46
      %s70 = sphi 0, %s72
      %s73 = sphi 0, %s70
      %s74 = sphi 0, %s73
      %s90 = sphi 0, %s74
      %s100 = sphi 0, %s102
      %s103 = sphi 0, %s100
      %s104 = sphi 0, %s103
      %s120 = sphi 0, %s104
    $region4: #{shuffle_patches.1} parent=1 // loop_header_branch
      %14 = sbr.rel (%p12) target = $region8
    $region5: #{shuffle_patches.1} parent=1 // loop_body
      %s16 = ssub.s32 %s11, 1
      %s17 = ssub.s32 %s11, 2
      %s27 = sadd.s32 1, %s20
      %p28 = scmp.ge.s32.totalorder %s27, 1
      %s29 = scalar_select %p28, 0, %s27
      %s30 = sadd.s32 1, %s19
      %s31 = scalar_select %p28, %s30, %s19
      %p32 = scmp.ge.s32.totalorder %s31, 1
      %s33 = scalar_select %p32, 0, %s31
      %s34 = sadd.s32 1, %s18
      %s35 = scalar_select %p32, %s34, %s18
      %p36 = scmp.ge.s32.totalorder %s35, 2
      %s37 = scalar_select %p36, 0, %s35
      %s38 = ssub.s32 %s18, %s37
      %s39 = ssub.s32 %s20, %s29
      %s40 = sor.u32 %s38, %s39
      %p41 = scmp.eq.s32.totalorder %s40, 0
      %s43 = sadd.s32 %s42, 1
      %s44 = scalar_select %p41, %s42, %s43
      %p47 = pneg %p41
      %p48 = scmp.eq.s32.totalorder %s11, 1
      %p49 = por %p47, %p48
      %p50 = scmp.ne.s32.totalorder %s42, %s45
      %p51 = scmp.eq.s32.totalorder %s11, 0
      %p52 = por %p50, %p51
      %p53 = scmp.ne.s32.totalorder %s42, %s45
      %p54 = scmp.eq.s32.totalorder %s16, 1
      %p55 = por %p53, %p54
      %p56 = scmp.ne.s32.totalorder %s45, %s46
      %p57 = scmp.eq.s32.totalorder %s16, 0
      %p58 = por %p56, %p57
      %p59 = scmp.ne.s32.totalorder %s45, %s46
      %p60 = scmp.eq.s32.totalorder %s17, 1
      %p61 = por %p59, %p60
      %p63 = scmp.ne.s32.totalorder %s46, %s62
      %p64 = scmp.eq.s32.totalorder %s17, 0
      %p65 = por %p63, %p64
      %s66 = ssub.s32 %s18, %s37
      %s67 = ssub.s32 %s19, %s33
      %s68 = sor.u32 %s66, %s67
      %p69 = scmp.eq.s32.totalorder %s68, 0
      %s71 = sadd.s32 %s70, 1
      %s72 = scalar_select %p69, %s70, %s71
      %p75 = pneg %p69
      %p76 = scmp.eq.s32.totalorder %s11, 1
      %p77 = por %p75, %p76
      %p78 = scmp.ne.s32.totalorder %s70, %s73
      %p79 = scmp.eq.s32.totalorder %s11, 0
      %p80 = por %p78, %p79
      %p81 = scmp.ne.s32.totalorder %s70, %s73
      %p82 = scmp.eq.s32.totalorder %s16, 1
      %p83 = por %p81, %p82
      %p84 = scmp.ne.s32.totalorder %s73, %s74
      %p85 = scmp.eq.s32.totalorder %s16, 0
      %p86 = por %p84, %p85
      %p87 = scmp.ne.s32.totalorder %s73, %s74
      %p88 = scmp.eq.s32.totalorder %s17, 1
      %p89 = por %p87, %p88
      %p91 = scmp.ne.s32.totalorder %s74, %s90
      %p92 = scmp.eq.s32.totalorder %s17, 0
      %p93 = por %p91, %p92
      %s94 = ssub.s32 %s18, %s37
      %s95 = ssub.s32 %s20, %s29
      %s96 = sor.u32 %s94, %s95
      %s97 = ssub.s32 %s19, %s33
      %s98 = sor.u32 %s96, %s97
      %p99 = scmp.eq.s32.totalorder %s98, 0
      %s101 = sadd.s32 %s100, 1
      %s102 = scalar_select %p99, %s100, %s101
      %p105 = pneg %p99
      %p106 = scmp.eq.s32.totalorder %s11, 1
      %p107 = por %p105, %p106
      %p108 = scmp.ne.s32.totalorder %s100, %s103
      %p109 = scmp.eq.s32.totalorder %s11, 0
      %p110 = por %p108, %p109
      %p111 = scmp.ne.s32.totalorder %s100, %s103
      %p112 = scmp.eq.s32.totalorder %s16, 1
      %p113 = por %p111, %p112
      %p114 = scmp.ne.s32.totalorder %s103, %s104
      %p115 = scmp.eq.s32.totalorder %s16, 0
      %p116 = por %p114, %p115
      %p117 = scmp.ne.s32.totalorder %s103, %s104
      %p118 = scmp.eq.s32.totalorder %s17, 1
      %p119 = por %p117, %p118
      %p121 = scmp.ne.s32.totalorder %s104, %s120
      %p122 = scmp.eq.s32.totalorder %s17, 0
      %p123 = por %p121, %p122
      %p124 = scmp.le.s32.totalorder 1, %s11
      %p125 = scmp.lt.s32.totalorder %s11, 3
      %p126 = pnand %p124, %p125
      %p127 = pneg %p126
      // Predicated region
      $region9: #{shuffle_patches.1} parent=5 // pred_check
        _
      $region10: #{shuffle_patches.1} parent=5 // pred_check_branch
        %129 = sbr.rel (%p126) target = $region12
      $region11: #{shuffle_patches.1} parent=5 // pred_region
        %s130 = ssub.s32 %s11, 1
      $region12: #{shuffle_patches.1} parent=5 // pred_fallthru
        _
      %p131 = scmp.lt.s32.totalorder %s11, 2
      // Predicated region
      $region13: #{shuffle_patches.1} parent=5 // pred_check
        %p132 = pneg %p131
      $region14: #{shuffle_patches.1} parent=5 // pred_check_branch
        %134 = sbr.rel (%p132) target = $region16
      $region15: #{shuffle_patches.1} parent=5 // pred_region
        // Predicated region
        $region17: #{shuffle_patches.1} parent=15 // pred_check
          %p135 = pneg %p52
        $region18: #{shuffle_patches.1} parent=15 // pred_check_branch
          %137 = sbr.rel (%p135) target = $region20
        $region19: #{shuffle_patches.1} parent=15 // pred_region
          %p138 = scmp.lt.s32.totalorder %s18, 1
          %s139 = scalar_select %p138, %s18, 1
          %p140 = scmp.lt.s32.totalorder %s20, 0
          %s141 = scalar_select %p140, %s20, 0
          %s142 = sadd.s32 %s141, %s139
          %s143 = smul.addr %s142, 8
          %s144 = scalar_lea.vmem %s0, %s143
        $region20: #{shuffle_patches.1} parent=15 // pred_fallthru
          _
        // Predicated region
        $region21: #{shuffle_patches.1} parent=15 // pred_check
          %p145 = pneg %p80
        $region22: #{shuffle_patches.1} parent=15 // pred_check_branch
          %147 = sbr.rel (%p145) target = $region24
        $region23: #{shuffle_patches.1} parent=15 // pred_region
          %p148 = scmp.lt.s32.totalorder %s18, 1
          %s149 = scalar_select %p148, %s18, 1
          %p150 = scmp.lt.s32.totalorder %s19, 0
          %s151 = scalar_select %p150, %s19, 0
          %s152 = sadd.s32 %s151, %s149
          %s153 = smul.addr %s152, 8
          %s154 = scalar_lea.vmem %s1, %s153
        $region24: #{shuffle_patches.1} parent=15 // pred_fallthru
          _
      $region16: #{shuffle_patches.1} parent=5 // pred_fallthru
        _
      %p155 = scmp.le.s32.totalorder 1, %s11
      %p156 = scmp.lt.s32.totalorder %s11, 3
      %p157 = pnand %p155, %p156
      %p158 = pneg %p157
      // Predicated region
      $region25: #{shuffle_patches.1} parent=5 // pred_check
        _
      $region26: #{shuffle_patches.1} parent=5 // pred_check_branch
        %160 = sbr.rel (%p157) target = $region28
      $region27: #{shuffle_patches.1} parent=5 // pred_region
        %s161 = ssub.s32 %s11, 1
        %p162 = scmp.lt.s32.totalorder %s21, 1
        %s163 = scalar_select %p162, %s21, 1
        %p164 = scmp.lt.s32.totalorder %s23, 0
        %s165 = scalar_select %p164, %s23, 0
        %s166 = sadd.s32 %s165, %s163
        %s167 = smul.addr %s166, 8
        %s168 = scalar_lea.vmem %s0, %s167
        %p169 = pneg %p58
        %p170 = pneg %p55
        %p171 = scmp.lt.s32.totalorder %s21, 1
        %s172 = scalar_select %p171, %s21, 1
        %p173 = scmp.lt.s32.totalorder %s22, 0
        %s174 = scalar_select %p173, %s22, 0
        %s175 = sadd.s32 %s174, %s172
        %s176 = smul.addr %s175, 8
        %s177 = scalar_lea.vmem %s1, %s176
        %p178 = pneg %p86
        %p179 = pneg %p83
        %p180 = pneg %p116
        %p181 = pneg %p113
        %s182 = sand.u32 %s103, 1
        %s183 = scalar_lea.sflag [#allocation3], %s182
        %s184 = sand.u32 %s103, 1
        %s185 = smul.addr %s184, 8
        %s186 = scalar_lea.vmem [#allocation2], %s185
        %p187 = scmp.lt.s32.totalorder %s21, 1
        %s188 = scalar_select %p187, %s21, 1
        %p189 = scmp.lt.s32.totalorder %s23, 0
        %s190 = scalar_select %p189, %s23, 0
        %s191 = sadd.s32 %s190, %s188
        %s192 = smul.addr %s191, 8
        %s193 = scalar_lea.vmem %s0, %s192
        %p194 = scmp.lt.s32.totalorder %s21, 1
        %s195 = scalar_select %p194, %s21, 1
        %p196 = scmp.lt.s32.totalorder %s22, 0
        %s197 = scalar_select %p196, %s22, 0
        %s198 = sadd.s32 %s197, %s195
        %s199 = smul.addr %s198, 8
        %s200 = scalar_lea.vmem %s1, %s199
        %v201 = vld [vmem:[%s193] sm:$0xff]
        %v202 = vlaneseq
        %v203 = vand.u32 %v202, 127
        %204 = vset.pattern.permute.xlu0 0
        %205 = vperm.xlu0 %204, %v201
        %v206 = vpop.permute.xlu0 %205
        %vm207 = vcmp.eq.s32.totalorder %v206, %v203
        %v208 = vsel %vm207, 1, 0
        %v209 = vcvt.s32.f32 %v208
        %v210 = vld [vmem:[%s200] sm:$0xff]
        %vm211 = vcmask 64512
        %v213 = vsel %vm211, %v209, 0
        %215 = vmatprep.subr.mxu0 0.0
        %216 = vmatpush1.msra.mxu0 0.0
        %217 = vmatprep.subr.mxu0 0.0
        %218 = vmatpush1.msra.mxu0 0.0
        %219 = vmatprep.subr.mxu0 0.0
        %220 = vmatpush1.msra.mxu0 0.0
        %221 = vmatprep.subr.mxu0 0.0
        %222 = vmatpush1.msra.mxu0 0.0
        %223 = vmatprep.subr.mxu0 0.0
        %224 = vmatpush1.msra.mxu0 0.0
        %225 = vmatprep.subr.mxu0 0.0
        %226 = vmatpush1.msra.mxu0 0.0
        %227 = vmatprep.subr.mxu0 0.0
        %228 = vmatpush1.msra.mxu0 0.0
        %229 = vmatprep.subr.mxu0 0.0
        %230 = vmatpush1.msra.mxu0 0.0
        %231 = vmatprep.subr.mxu0 0.0
        %232 = vmatpush1.msra.mxu0 0.0
        %233 = vmatprep.subr.mxu0 0.0
        %234 = vmatpush1.msra.mxu0 0.0
        %235 = vmatprep.subr.mxu0 0.0
        %236 = vmatpush1.msra.mxu0 0.0
        %237 = vmatprep.subr.mxu0 0.0
        %238 = vmatpush1.msra.mxu0 0.0
        %239 = vmatprep.subr.mxu0 0.0
        %240 = vmatpush1.msra.mxu0 0.0
        %241 = vmatprep.subr.mxu0 0.0
        %242 = vmatpush1.msra.mxu0 0.0
        %243 = vmatprep.subr.mxu0 0.0
        %244 = vmatpush1.msra.mxu0 0.0
        %245 = vmatprep.subr.mxu0 0.0
        %246 = vmatpush1.msra.mxu0 %v210
        %247 = vmatprep.subr.mxu0 0.0
        %248 = vmatpush2.msra.mxu0 0.0
        %249 = vmatprep.subr.mxu0 0.0
        %250 = vmatpush2.msra.mxu0 0.0
        %251 = vmatprep.subr.mxu0 0.0
        %252 = vmatpush2.msra.mxu0 0.0
        %253 = vmatprep.subr.mxu0 0.0
        %254 = vmatpush2.msra.mxu0 0.0
        %255 = vmatprep.subr.mxu0 0.0
        %256 = vmatpush2.msra.mxu0 0.0
        %257 = vmatprep.subr.mxu0 0.0
        %258 = vmatpush2.msra.mxu0 0.0
        %259 = vmatprep.subr.mxu0 0.0
        %260 = vmatpush2.msra.mxu0 0.0
        %261 = vmatprep.subr.mxu0 0.0
        %262 = vmatpush2.msra.mxu0 0.0
        %263 = vmatprep.subr.mxu0 0.0
        %264 = vmatpush2.msra.mxu0 0.0
        %265 = vmatprep.subr.mxu0 0.0
        %266 = vmatpush2.msra.mxu0 0.0
        %267 = vmatprep.subr.mxu0 0.0
        %268 = vmatpush2.msra.mxu0 0.0
        %269 = vmatprep.subr.mxu0 0.0
        %270 = vmatpush2.msra.mxu0 0.0
        %271 = vmatprep.subr.mxu0 0.0
        %272 = vmatpush2.msra.mxu0 0.0
        %273 = vmatprep.subr.mxu0 0.0
        %274 = vmatpush2.msra.mxu0 0.0
        %275 = vmatprep.subr.mxu0 0.0
        %276 = vmatpush2.msra.mxu0 0.0
        %277 = vmatprep.subr.mxu0 0.0
        %278 = vmatpush2.msra.mxu0 0.0
        %279 = vmatprep.mubr.f32.mxu0 0.0
        %280 = vmatmul.mubr.f32.gmra.mxu0 %v213
        %v281 = vpop.f32.mrf.mxu0
        %v282 = vadd.f32 0.0, %v281
        %v283 = vpop.f32.mrf.mxu0
        %284 = vdwg.mxu0
        %vm285 = vcmask 261120
        %286 = vst.msk [vmem:[%s186] sm:$0xff] %vm285, %v282
        %s287 = sand.u32 %s103, 1
        %s288 = scalar_lea.sflag [#allocation3], %s287
        %s289 = sand.u32 %s103, 1
        %s290 = smul.addr %s289, 8
        %s291 = scalar_lea.vmem [#allocation2], %s290
        // Predicated region
        $region29: #{shuffle_patches.1} parent=27 // pred_check
          %p292 = pneg %p113
        $region30: #{shuffle_patches.1} parent=27 // pred_check_branch
          %294 = sbr.rel (%p292) target = $region32
        $region31: #{shuffle_patches.1} parent=27 // pred_region
          %s296 = ssub.s32 128, 128
          %297 = vsyncadd %s288, %s296
          %s298 = sadd.s32 %s22, %s23
          %s299 = sadd.s32 %s298, %s21
          %s300 = smul.addr %s299, 128
          %s301 = scalar_lea.hbm %s2, %s300
          %s303 = sshll.u32 %s291, 4
          %s304 = int_to_ptr.vmem [resolvable:$true] %s303
          %306 = dma.vmem_to_hbm [thread:$0]  %s304, 128, %s301, %s288
        $region32: #{shuffle_patches.1} parent=27 // pred_fallthru
          _
      $region28: #{shuffle_patches.1} parent=5 // pred_fallthru
        _
      %p307 = scmp.le.s32.totalorder 2, %s11
      // Predicated region
      $region33: #{shuffle_patches.1} parent=5 // pred_check
        %p308 = pneg %p307
      $region34: #{shuffle_patches.1} parent=5 // pred_check_branch
        %310 = sbr.rel (%p308) target = $region36
      $region35: #{shuffle_patches.1} parent=5 // pred_region
        %s311 = ssub.s32 %s11, 2
        // Predicated region
        $region37: #{shuffle_patches.1} parent=35 // pred_check
          %p312 = pneg %p119
        $region38: #{shuffle_patches.1} parent=35 // pred_check_branch
          %314 = sbr.rel (%p312) target = $region40
        $region39: #{shuffle_patches.1} parent=35 // pred_region
          %s315 = sand.u32 %s104, 1
          %s316 = scalar_lea.sflag [#allocation3], %s315
          %s317 = sand.u32 %s104, 1
          %s318 = smul.addr %s317, 8
          %s319 = scalar_lea.vmem [#allocation2], %s318
          %320 = dma.done %s316, 128
        $region40: #{shuffle_patches.1} parent=35 // pred_fallthru
          _
      $region36: #{shuffle_patches.1} parent=5 // pred_fallthru
        _
    $region6: #{shuffle_patches.1} parent=1 // loop_footer
      %s15 = sadd.s32 1, %s11
    $region7: #{shuffle_patches.1} parent=1 // loop_footer_branch
      %10 = sbr.rel target = $region3
    $region8: #{shuffle_patches.1} parent=1 // loop_exit
      _
    %321 = vsyncpa [#allocation3], 1
    %s322 = scalar_lea.sflag [#allocation3], 1
    %323 = vsyncpa %s322, 1

</llo_original>
